<compile_context>
chip_gen: v5e
topology: v5e:2x2
jax: 0.10.0
libtpu: 0.0.40
codegen_flags: <defaults>
</compile_context>

<pallas_src>
import functools

import jax
import jax.numpy as jnp
from jax import lax
from jax.experimental import pallas as pl
from jax.experimental.pallas import tpu as pltpu

TEMPERATURE = 0.07
EPS = 1e-6          # matches DCLLoss.__init__ eps
COS_EPS = 1e-8      # torch.nn.CosineSimilarity default eps


def _round_up(x, m):
    return (x + m - 1) // m * m


def _dcl_kernel(z_ref, o_ref, acc_ref, pos_ref, *,
                n, batch_size, tile, lanes, eps, exp_dtype):
    b = batch_size
    tm = tile
    i = pl.program_id(0)          # row-tile index  ("parallel")
    k = pl.program_id(1)          # col-tile index  (reduction, "arbitrary")

    # ---- once per row tile: clear the accumulators (scratch is per-core, and the
    #      row axis may be sharded across TensorCores, so gate on k == 0).
    @pl.when(k == 0)
    def _init():
        acc_ref[...] = jnp.zeros_like(acc_ref)
        pos_ref[...] = jnp.zeros_like(pos_ref)

    r0 = i * tm
    c0 = k * tm
    zr = z_ref[pl.ds(pl.multiple_of(r0, tm), tm), :]     # (tm, D) row tile
    zc = z_ref[pl.ds(pl.multiple_of(c0, tm), tm), :]     # (tm, D) col tile

    # One MXU matmul per tile; s == sim / temperature (sqrt(1/T) folded into z rows).
    # Operands are already in compute_dtype (bf16 by default) -> full MXU rate.
    s = lax.dot_general(zr, zc, dimension_numbers=(((1,), (1,)), ((), ())),
                        preferred_element_type=jnp.float32)
    e = jnp.exp(s.astype(exp_dtype))                      # (tm, tm)

    def _lane_blocked_sum(x):
        # (tm, tm) -> (tm, lanes) using only lane-aligned slices + VPU adds.
        # The single cross-lane (XLU) reduce is deferred to the finalize step.
        upd = x[:, 0:lanes]
        for j in range(1, tm // lanes):
            upd = upd + x[:, j * lanes:(j + 1) * lanes]
        return upd

    # Column tiles that can contain excluded entries for this row tile:
    #   diagonal columns [r0, r1), positive-pair columns (r + b) mod n (at most two
    #   contiguous ranges), and the zero-padded columns [n, n_pad).
    r1 = jnp.minimum(r0 + tm, n)
    c_hi = c0 + tm

    def _hits(lo, hi):                                    # [lo, hi) vs [c0, c_hi)
        return jnp.logical_and(lo < c_hi, hi > c0)

    needs_mask = _hits(r0, r1)
    needs_mask = jnp.logical_or(needs_mask, _hits(r0 + b, jnp.minimum(r1 + b, n)))
    needs_mask = jnp.logical_or(needs_mask,
                                _hits(jnp.maximum(r0 + b, n) - n, r1 + b - n))
    needs_mask = jnp.logical_or(needs_mask, c_hi > n)     # padded columns

    @pl.when(needs_mask)
    def _masked_accumulate():
        r_g = r0 + lax.broadcasted_iota(jnp.int32, (tm, tm), 0)
        c_g = c0 + lax.broadcasted_iota(jnp.int32, (tm, tm), 1)
        is_pos = c_g == lax.rem(r_g + b, n)
        keep = jnp.logical_and(c_g < n,
                               jnp.logical_and(c_g != r_g, jnp.logical_not(is_pos)))
        acc_ref[...] += _lane_blocked_sum(jnp.where(keep, e, 0.0)).astype(jnp.float32)
        # Capture sim_pos / T straight from this tile's matmul result (exactly one
        # positive column per real row across the whole row).
        pos_ref[...] += jnp.sum(jnp.where(is_pos, s, 0.0), axis=1, keepdims=True)

    @pl.when(jnp.logical_not(needs_mask))
    def _plain_accumulate():
        acc_ref[...] += _lane_blocked_sum(e).astype(jnp.float32)

    # ---- finalize this row tile: single cross-lane reduce + log-space loss.
    @pl.when(k == pl.num_programs(1) - 1)
    def _finalize():
        sum_neg = jnp.sum(acc_ref[...], axis=1, keepdims=True) + eps
        o_ref[...] = jnp.log(sum_neg + eps) - pos_ref[...]


def dcl_loss(z_i, z_j, temperature=TEMPERATURE, eps=EPS, *,
             row_tile=256, compute_dtype=jnp.bfloat16, exp_dtype=jnp.float32):
    """One-way DCL loss. compute_dtype=bf16 feeds the MXU at full rate (v5e users
    that want f32 elementwise everywhere can pass compute_dtype=jnp.float32)."""
    assert z_i.shape == z_j.shape and z_i.ndim == 2
    b, d = z_i.shape
    n = 2 * b

    # ---- normalize once (tiny O(N*D) op), fold sqrt(1/T), pad rows to a tile
    #      multiple. Per-row norm clamp matches torch's CosineSimilarity eps.
    inv_sqrt_t = 1.0 / float(temperature) ** 0.5
    z = jnp.concatenate([z_i, z_j], axis=0).astype(jnp.float32)
    sq = jnp.sum(z * z, axis=-1, keepdims=True)
    zn = z * (inv_sqrt_t * lax.rsqrt(jnp.maximum(sq, COS_EPS * COS_EPS)))

    tm = _round_up(min(int(row_tile), _round_up(n, 8)), 8)   # square tile, mult of 8
    n_pad = _round_up(n, tm)
    if n_pad > n:
        zn = jnp.pad(zn, ((0, n_pad - n), (0, 0)))
    zn = zn.astype(compute_dtype)

    lanes = 128 if tm % 128 == 0 else tm                     # lane-block width
    nb = n_pad // tm

    kernel = functools.partial(
        _dcl_kernel, n=n, batch_size=b, tile=tm, lanes=lanes,
        eps=float(eps), exp_dtype=exp_dtype)

    # VMEM budget: resident (double-buffered) zn + scratch + per-tile temporaries,
    # capped by the chip's VMEM (v5e: 128 MiB, v7x: 64 MiB per TensorCore).
    itemsize = jnp.dtype(compute_dtype).itemsize
    needed = (2 * n_pad * d * itemsize
              + tm * max(lanes, 128) * 4 + tm * 128 * 4
              + 6 * tm * tm * 4
              + (2 << 20))
    try:
        cap = int(pltpu.get_tpu_info().vmem_capacity_bytes) * 3 // 4
    except Exception:
        cap = 32 * 1024 * 1024
    cap = max(cap, 16 * 1024 * 1024)
    vmem_limit = int(min(max(needed, 16 * 1024 * 1024), cap))

    neg_log = pl.pallas_call(
        kernel,
        out_shape=jax.ShapeDtypeStruct((n_pad, 1), jnp.float32),
        grid_spec=pltpu.PrefetchScalarGridSpec(
            num_scalar_prefetch=0,
            grid=(nb, nb),
            in_specs=[
                # Single normalized z, resident in VMEM (block index never changes).
                # TODO(synk): pipeline_mode=pl.Buffered(1) would halve its residency
                # once single-buffered constant blocks are universally supported.
                pl.BlockSpec((n_pad, d), lambda i, k: (0, 0)),
            ],
            out_specs=pl.BlockSpec((tm, 1), lambda i, k: (i, 0)),
            scratch_shapes=[
                pltpu.VMEM((tm, lanes), jnp.float32),   # lane-blocked neg-sum acc
                pltpu.VMEM((tm, 1), jnp.float32),       # captured sim_pos / T
            ],
        ),
        compiler_params=pltpu.CompilerParams(
            dimension_semantics=("parallel", "arbitrary"),
            vmem_limit_bytes=vmem_limit),
        cost_estimate=pl.CostEstimate(
            flops=2 * n_pad * n_pad * d,
            transcendentals=n_pad * n_pad,
            bytes_accessed=n_pad * d * itemsize + n_pad * 4),
    )(zn)

    # Padded rows are dropped here; mean over the 2B real rows.
    return jnp.sum(neg_log[:n, 0]) / jnp.float32(n)


def _dcl_loss_ref(z_i, z_j, temperature=TEMPERATURE, eps=EPS):
    """Pure-JAX reference mirroring the PyTorch DCLLoss forward."""
    b = z_i.shape[0]
    n = 2 * b
    z = jnp.concatenate([z_i, z_j], axis=0).astype(jnp.float32)
    norms = jnp.linalg.norm(z, axis=-1, keepdims=True)
    dots = jnp.dot(z, z.T, precision=lax.Precision.HIGHEST)
    sim = dots / jnp.maximum(norms * norms.T, COS_EPS)
    e = jnp.exp(sim / temperature)
    pos = jnp.concatenate([jnp.diagonal(e, b), jnp.diagonal(e, -b)])[:, None]
    row = jnp.arange(n)[:, None]
    col = jnp.arange(n)[None, :]
    neg_mask = (row != col) & (col != (row + b) % n)
    sum_neg = jnp.sum(jnp.where(neg_mask, e, 0.0), axis=1, keepdims=True) + eps
    logit = pos / (sum_neg + eps)
    return jnp.sum(-jnp.log(logit)) / n


if __name__ == "__main__":
    key = jax.random.PRNGKey(0)
    k1, k2 = jax.random.split(key)
    batch, hidden = 8, 128
    z_i = jax.random.normal(k1, (batch, hidden), dtype=jnp.float32)
    z_j = jax.random.normal(k2, (batch, hidden), dtype=jnp.float32)

    ref = _dcl_loss_ref(z_i, z_j)

    # Default (bf16 MXU operands) path — looser tolerance per review guidance.
    loss_bf16 = dcl_loss(z_i, z_j)
    jax.block_until_ready(loss_bf16)
    assert jnp.allclose(loss_bf16, ref, rtol=2.5e-2, atol=2.5e-2), (loss_bf16, ref)

    # f32 reference-accuracy mode (e.g. for v5e-style all-f32 elementwise).
    loss_f32 = dcl_loss(z_i, z_j, compute_dtype=jnp.float32)
    jax.block_until_ready(loss_f32)
    assert jnp.allclose(loss_f32, ref, rtol=1e-3, atol=1e-3), (loss_f32, ref)

    print("KERNEL_OK")
</pallas_src>

<mosaic_0001>
module attributes {stable_mosaic.version = 11 : i64} {
  func.func @_dcl_kernel(%arg0: i32, %arg1: i32, %arg2: memref<16x128xbf16, #tpu.memory_space<vmem>>, %arg3: memref<16x1xf32, #tpu.memory_space<vmem>>, %arg4: memref<16x16xf32, #tpu.memory_space<vmem>>, %arg5: memref<16x1xf32, #tpu.memory_space<vmem>>) attributes {dimension_semantics = [#tpu.dimension_semantics<parallel>, #tpu.dimension_semantics<arbitrary>], iteration_bounds = array<i64: 1, 1>, scalar_prefetch = 0 : i64, scratch_operands = 2 : i64, tpu.core_type = #tpu.core_type<tc>, window_params = [{pipeline_mode = #tpu.pipeline_mode<synchronous>, transform_indices = @transform_0, window_bounds = array<i64: 16, 128>}, {transform_indices = @transform_1, window_bounds = array<i64: 16, 1>}]} {
    %c0_i32 = arith.constant 0 : i32
    %0 = arith.cmpi eq, %arg1, %c0_i32 : i32
    %1 = arith.extui %0 : i1 to i32
    %c0_i32_0 = arith.constant 0 : i32
    %2 = arith.cmpi ne, %1, %c0_i32_0 : i32
    scf.if %2 {
      %cst_18 = arith.constant 0.000000e+00 : f32
      %45 = vector.broadcast %cst_18 : f32 to vector<16x16xf32>
      %c0_19 = arith.constant 0 : index
      %c0_20 = arith.constant 0 : index
      %46 = vector.load %arg4[%c0_19, %c0_20] : memref<16x16xf32, #tpu.memory_space<vmem>>, vector<16x16xf32>
      tpu.vector_store %arg4[%c0_19, %c0_20], %45 {strides = array<i32>} : memref<16x16xf32, #tpu.memory_space<vmem>>, vector<16x16xf32>,
      %cst_21 = arith.constant 0.000000e+00 : f32
      %47 = vector.broadcast %cst_21 : f32 to vector<16x1xf32>
      %c0_22 = arith.constant 0 : index
      %c0_23 = arith.constant 0 : index
      %48 = vector.load %arg5[%c0_22, %c0_23] : memref<16x1xf32, #tpu.memory_space<vmem>>, vector<16x1xf32>
      tpu.vector_store %arg5[%c0_22, %c0_23], %47 {strides = array<i32>} : memref<16x1xf32, #tpu.memory_space<vmem>>, vector<16x1xf32>,
    } else {
    }
    %c16_i32 = arith.constant 16 : i32
    %3 = arith.muli %arg0, %c16_i32 : i32
    %c16_i32_1 = arith.constant 16 : i32
    %4 = arith.muli %arg1, %c16_i32_1 : i32
    %5 = tpu.assume_multiple %3, 16 : i32
    %6 = arith.index_cast %5 : i32 to index
    %c0 = arith.constant 0 : index
    %7 = vector.load %arg2[%6, %c0] : memref<16x128xbf16, #tpu.memory_space<vmem>>, vector<16x128xbf16>
    %8 = tpu.assume_multiple %4, 16 : i32
    %9 = arith.index_cast %8 : i32 to index
    %c0_2 = arith.constant 0 : index
    %10 = vector.load %arg2[%9, %c0_2] : memref<16x128xbf16, #tpu.memory_space<vmem>>, vector<16x128xbf16>
    %cst = arith.constant dense<0.000000e+00> : vector<16x16xf32>
    %11 = tpu.matmul %7, %10, %cst {dimension_numbers = #tpu.dot_dimension_numbers<[1], [1], [0], [0], [0, 0, 1, 0], [], []>} : vector<16x128xbf16>, vector<16x128xbf16>, vector<16x16xf32> -> vector<16x16xf32>
    %12 = math.exp %11 : vector<16x16xf32>
    %c16_i32_3 = arith.constant 16 : i32
    %13 = arith.addi %3, %c16_i32_3 : i32
    %c16_i32_4 = arith.constant 16 : i32
    %14 = arith.minsi %13, %c16_i32_4 : i32
    %c16_i32_5 = arith.constant 16 : i32
    %15 = arith.addi %4, %c16_i32_5 : i32
    %16 = arith.cmpi slt, %3, %15 : i32
    %17 = arith.cmpi sgt, %14, %4 : i32
    %18 = arith.andi %16, %17 : i1
    %c8_i32 = arith.constant 8 : i32
    %19 = arith.addi %3, %c8_i32 : i32
    %c8_i32_6 = arith.constant 8 : i32
    %20 = arith.addi %14, %c8_i32_6 : i32
    %c16_i32_7 = arith.constant 16 : i32
    %21 = arith.minsi %20, %c16_i32_7 : i32
    %22 = arith.cmpi slt, %19, %15 : i32
    %23 = arith.cmpi sgt, %21, %4 : i32
    %24 = arith.andi %22, %23 : i1
    %25 = arith.ori %18, %24 : i1
    %c8_i32_8 = arith.constant 8 : i32
    %26 = arith.addi %3, %c8_i32_8 : i32
    %c16_i32_9 = arith.constant 16 : i32
    %27 = arith.maxsi %26, %c16_i32_9 : i32
    %c16_i32_10 = arith.constant 16 : i32
    %28 = arith.subi %27, %c16_i32_10 : i32
    %c8_i32_11 = arith.constant 8 : i32
    %29 = arith.addi %14, %c8_i32_11 : i32
    %c16_i32_12 = arith.constant 16 : i32
    %30 = arith.subi %29, %c16_i32_12 : i32
    %31 = arith.cmpi slt, %28, %15 : i32
    %32 = arith.cmpi sgt, %30, %4 : i32
    %33 = arith.andi %31, %32 : i1
    %34 = arith.ori %25, %33 : i1
    %c16_i32_13 = arith.constant 16 : i32
    %35 = arith.cmpi sgt, %15, %c16_i32_13 : i32
    %36 = arith.ori %34, %35 : i1
    %37 = arith.extui %36 : i1 to i32
    %c0_i32_14 = arith.constant 0 : i32
    %38 = arith.cmpi ne, %37, %c0_i32_14 : i32
    scf.if %38 {
      %45 = tpu.iota {dimensions = array<i32: 0>} : vector<16x16xi32>
      %46 = vector.broadcast %3 : i32 to vector<16x16xi32>
      %47 = arith.addi %46, %45 : vector<16x16xi32>
      %48 = tpu.iota {dimensions = array<i32: 1>} : vector<16x16xi32>
      %49 = vector.broadcast %4 : i32 to vector<16x16xi32>
      %50 = arith.addi %49, %48 : vector<16x16xi32>
      %c8_i32_18 = arith.constant 8 : i32
      %51 = vector.broadcast %c8_i32_18 : i32 to vector<16x16xi32>
      %52 = arith.addi %47, %51 : vector<16x16xi32>
      %c16_i32_19 = arith.constant 16 : i32
      %53 = vector.broadcast %c16_i32_19 : i32 to vector<16x16xi32>
      %54 = arith.remsi %52, %53 : vector<16x16xi32>
      %55 = arith.cmpi eq, %50, %54 : vector<16x16xi32>
      %c16_i32_20 = arith.constant 16 : i32
      %56 = vector.broadcast %c16_i32_20 : i32 to vector<16x16xi32>
      %57 = arith.cmpi slt, %50, %56 : vector<16x16xi32>
      %58 = arith.cmpi ne, %50, %47 : vector<16x16xi32>
      %cst_21 = arith.constant dense<true> : vector<16x16xi1>
      %59 = arith.xori %55, %cst_21 : vector<16x16xi1>
      %60 = arith.andi %58, %59 : vector<16x16xi1>
      %61 = arith.andi %57, %60 : vector<16x16xi1>
      %c0_22 = arith.constant 0 : index
      %c0_23 = arith.constant 0 : index
      %62 = vector.load %arg4[%c0_22, %c0_23] : memref<16x16xf32, #tpu.memory_space<vmem>>, vector<16x16xf32>
      %cst_24 = arith.constant 0.000000e+00 : f32
      %63 = vector.broadcast %cst_24 : f32 to vector<16x16xf32>
      %64 = arith.select %61, %12, %63 : vector<16x16xi1>, vector<16x16xf32>
      %65 = arith.addf %62, %64 : vector<16x16xf32>
      %c0_25 = arith.constant 0 : index
      %c0_26 = arith.constant 0 : index
      %66 = vector.load %arg4[%c0_25, %c0_26] : memref<16x16xf32, #tpu.memory_space<vmem>>, vector<16x16xf32>
      tpu.vector_store %arg4[%c0_25, %c0_26], %65 {strides = array<i32>} : memref<16x16xf32, #tpu.memory_space<vmem>>, vector<16x16xf32>,
      %c0_27 = arith.constant 0 : index
      %c0_28 = arith.constant 0 : index
      %67 = vector.load %arg5[%c0_27, %c0_28] : memref<16x1xf32, #tpu.memory_space<vmem>>, vector<16x1xf32>
      %cst_29 = arith.constant 0.000000e+00 : f32
      %68 = vector.broadcast %cst_29 : f32 to vector<16x16xf32>
      %69 = arith.select %55, %11, %68 : vector<16x16xi1>, vector<16x16xf32>
      %cst_30 = arith.constant dense<0.000000e+00> : vector<16xf32>
      %70 = vector.multi_reduction <add>, %69, %cst_30 [1] : vector<16x16xf32> to vector<16xf32>
      %71 = vector.shape_cast %70 : vector<16xf32> to vector<16x1xf32>
      %72 = arith.addf %67, %71 : vector<16x1xf32>
      %c0_31 = arith.constant 0 : index
      %c0_32 = arith.constant 0 : index
      %73 = vector.load %arg5[%c0_31, %c0_32] : memref<16x1xf32, #tpu.memory_space<vmem>>, vector<16x1xf32>
      tpu.vector_store %arg5[%c0_31, %c0_32], %72 {strides = array<i32>} : memref<16x1xf32, #tpu.memory_space<vmem>>, vector<16x1xf32>,
    } else {
    }
    %true = arith.constant true
    %39 = arith.xori %36, %true : i1
    %40 = arith.extui %39 : i1 to i32
    %c0_i32_15 = arith.constant 0 : i32
    %41 = arith.cmpi ne, %40, %c0_i32_15 : i32
    scf.if %41 {
      %c0_18 = arith.constant 0 : index
      %c0_19 = arith.constant 0 : index
      %45 = vector.load %arg4[%c0_18, %c0_19] : memref<16x16xf32, #tpu.memory_space<vmem>>, vector<16x16xf32>
      %46 = arith.addf %45, %12 : vector<16x16xf32>
      %c0_20 = arith.constant 0 : index
      %c0_21 = arith.constant 0 : index
      %47 = vector.load %arg4[%c0_20, %c0_21] : memref<16x16xf32, #tpu.memory_space<vmem>>, vector<16x16xf32>
      tpu.vector_store %arg4[%c0_20, %c0_21], %46 {strides = array<i32>} : memref<16x16xf32, #tpu.memory_space<vmem>>, vector<16x16xf32>,
    } else {
    }
    %c0_i32_16 = arith.constant 0 : i32
    %42 = arith.cmpi eq, %arg1, %c0_i32_16 : i32
    %43 = arith.extui %42 : i1 to i32
    %c0_i32_17 = arith.constant 0 : i32
    %44 = arith.cmpi ne, %43, %c0_i32_17 : i32
    scf.if %44 {
      %c0_18 = arith.constant 0 : index
      %c0_19 = arith.constant 0 : index
      %45 = vector.load %arg4[%c0_18, %c0_19] : memref<16x16xf32, #tpu.memory_space<vmem>>, vector<16x16xf32>
      %cst_20 = arith.constant dense<0.000000e+00> : vector<16xf32>
      %46 = vector.multi_reduction <add>, %45, %cst_20 [1] : vector<16x16xf32> to vector<16xf32>
      %47 = vector.shape_cast %46 : vector<16xf32> to vector<16x1xf32>
      %cst_21 = arith.constant 9.99999997E-7 : f32
      %48 = vector.broadcast %cst_21 : f32 to vector<16x1xf32>
      %49 = arith.addf %47, %48 : vector<16x1xf32>
      %cst_22 = arith.constant 9.99999997E-7 : f32
      %50 = vector.broadcast %cst_22 : f32 to vector<16x1xf32>
      %51 = arith.addf %49, %50 : vector<16x1xf32>
      %52 = math.log %51 : vector<16x1xf32>
      %c0_23 = arith.constant 0 : index
      %c0_24 = arith.constant 0 : index
      %53 = vector.load %arg5[%c0_23, %c0_24] : memref<16x1xf32, #tpu.memory_space<vmem>>, vector<16x1xf32>
      %54 = arith.subf %52, %53 : vector<16x1xf32>
      %c0_25 = arith.constant 0 : index
      %c0_26 = arith.constant 0 : index
      %55 = vector.load %arg3[%c0_25, %c0_26] : memref<16x1xf32, #tpu.memory_space<vmem>>, vector<16x1xf32>
      tpu.vector_store %arg3[%c0_25, %c0_26], %54 {strides = array<i32>} : memref<16x1xf32, #tpu.memory_space<vmem>>, vector<16x1xf32>,
    } else {
    }
    return
  }
  func.func @transform_0(%arg0: i32, %arg1: i32) -> (i32, i32) {
    %c0_i32 = arith.constant 0 : i32
    %c0_i32_0 = arith.constant 0 : i32
    %c0_i32_1 = arith.constant 0 : i32
    return %c0_i32, %c0_i32_0 : i32, i32
  }
  func.func @transform_1(%arg0: i32, %arg1: i32) -> (i32, i32) {
    %c0_i32 = arith.constant 0 : i32
    %c0_i32_0 = arith.constant 0 : i32
    return %arg0, %c0_i32 : i32, i32
  }
}

</mosaic_0001>

<llo_original>
// kernel: tpu_custom_call.1
$region0: #{tpu_custom_call.1}
  #allocation0 [shape = 'u32[]', space=smem, size = 0x4, offset = 0x4, fixed_abs, tag = 'smem constant byte address 0x4 - core index']
  #allocation1 [shape = 'u32[72,128]{1,0:T(1,128)}', space=vmem, size = 0x9000, scoped, tag = 'internal scratch']
  #allocation2 [shape = 'f32[16,16]{1,0:T(8,128)}', space=vmem, size = 0x2000, scoped, tag = 'scratch operand']
  #allocation3 [shape = 'f32[16,1]{1,0:T(8,128)}', space=vmem, size = 0x2000, scoped, tag = 'scratch operand']
  %s0 = inlined_call_operand.hbm [shape: bf16[16,128], index: 0, kind: input, shape index: {}]
  %s1 = inlined_call_operand.vmem [shape: f32[16,1], index: 1, kind: output, shape index: {}]
  %s2 = sld [smem:[#allocation0]]
  $region34: #{tpu_custom_call.1} parent=0
    _
  %s4 = ssub.s32 1, %s2
  %s5 = scalar_select 0, %s4, %s2
  $region1: #{tpu_custom_call.1} parent=0
    #allocation4 [shape = 'u8[4096]{0}', space=vmem, size = 0x1000, scoped, tag = 'input window, operand 0, single buffered']
    #allocation5 [shape = 's32[1]{0}', space=sflag, size = 0x4, scoped, tag = 'scoped memory for tpu_custom_call.1']
    %6 = vsyncpa [#allocation5], 0
    // Predicated region
    $region2: #{tpu_custom_call.1} parent=1 // pred_check
      _
    $region3: #{tpu_custom_call.1} parent=1 // pred_check_branch
      %8 = sbr.rel (0) target = $region5
    $region4: #{tpu_custom_call.1} parent=1 // pred_region
      %10 = vsyncadd [#allocation5], 0
      %s11 = sshll.u32 %s0, 4
      %s12 = int_to_ptr.hbm [resolvable:$true] %s11
      %s13 = sshll.u32 [#allocation4], 4
      %s14 = int_to_ptr.vmem [resolvable:$true] %s13
      %19 = dma.hbm_to_vmem [thread:$0]  %s12, 128, %s14, [#allocation5], 64, 64, 4
    $region5: #{tpu_custom_call.1} parent=1 // pred_fallthru
      _
    // Predicated region
    $region6: #{tpu_custom_call.1} parent=1 // pred_check
      _
    $region7: #{tpu_custom_call.1} parent=1 // pred_check_branch
      %21 = sbr.rel (0) target = $region9
    $region8: #{tpu_custom_call.1} parent=1 // pred_region
      %23 = dma.done [#allocation5], 128
    $region9: #{tpu_custom_call.1} parent=1 // pred_fallthru
      _
    %p25 = scmp.eq.s32.totalorder 0, 0
    // Predicated region
    $region10: #{tpu_custom_call.1} parent=1 // pred_check
      %p26 = pneg %p25
    $region11: #{tpu_custom_call.1} parent=1 // pred_check_branch
      %28 = sbr.rel (%p26) target = $region13
    $region12: #{tpu_custom_call.1} parent=1 // pred_region
      %vm29 = vcmask 130048
      %30 = vst.msk [vmem:[#allocation2] sm:$0xff] %vm29, 0.0
      %31 = vst.msk [vmem:[#allocation2 + $0x8] sm:$0xff] %vm29, 0.0
      %vm32 = vcmask 7168
      %33 = vst.msk [vmem:[#allocation3] sm:$0xff] %vm32, 0.0
      %34 = vst.msk [vmem:[#allocation3 + $0x8] sm:$0xff] %vm32, 0.0
    $region13: #{tpu_custom_call.1} parent=1 // pred_fallthru
      _
    %s35 = smul.u32 0, 16
    %s36 = smul.u32 0, 16
    %s37 = sshra.s32 %s35, 3
    %s38 = sand.u32 %s35, 7
    %s39 = smul.addr %s37, 4
    %s40 = scalar_lea.vmem [#allocation4], %s39
    %v41 = vld [vmem:[%s40] sm:$0xf]
    %v42 = vld [vmem:[%s40 + $0x4] sm:$0xf]
    %s43 = sshra.s32 %s36, 3
    %s44 = sand.u32 %s36, 7
    %s45 = smul.addr %s43, 4
    %s46 = scalar_lea.vmem [#allocation4], %s45
    %v47 = vld [vmem:[%s46] sm:$0xf]
    %v48 = vld [vmem:[%s46 + $0x4] sm:$0xf]
    %v51 = vunpack.c.l.b16 %v41
    %v52 = vunpack.c.l.b16 %v42
    %v53 = vpack.c.b16 %v52, %v51
    %v57 = vunpack.c.l.b16 %v47
    %v58 = vunpack.c.l.b16 %v48
    %v59 = vpack.c.b16 %v58, %v57
    %61 = vmatpush.bf16.xpose.msra.mxu0 0
    %62 = vmatpush.bf16.xpose.msra.mxu0 0
    %63 = vmatpush.bf16.xpose.msra.mxu0 0
    %64 = vmatpush.bf16.xpose.msra.mxu0 0
    %65 = vmatpush.bf16.xpose.msra.mxu0 0
    %66 = vmatpush.bf16.xpose.msra.mxu0 0
    %67 = vmatpush.bf16.xpose.msra.mxu0 0
    %68 = vmatpush.bf16.xpose.msra.mxu0 %v59
    %69 = vmatmul.bf16.gmra.mxu0 %v53
    %v70 = vpop.f32.mrf.mxu0
    %v71 = vadd.f32 0.0, %v70
    %v72 = vpop.f32.mrf.mxu0
    %v73 = vadd.f32 0.0, %v72
    %74 = vdwg.mxu0
    %v75 = vmul.f32 %v71, 1.442695
    %v76 = vpow.pop %v75
    %v77 = vmul.f32 %v73, 1.442695
    %v78 = vpow.pop %v77
    %s79 = sadd.s32 %s35, 16
    %p80 = scmp.lt.s32.totalorder %s79, 16
    %s81 = scalar_select %p80, %s79, 16
    %s82 = sadd.s32 %s36, 16
    %p83 = scmp.lt.s32.totalorder %s35, %s82
    %p84 = scmp.gt.s32.totalorder %s81, %s36
    %p85 = pnand %p83, %p84
    %p86 = pneg %p85
    %s87 = sadd.s32 %s35, 8
    %s88 = sadd.s32 %s81, 8
    %p89 = scmp.lt.s32.totalorder %s88, 16
    %s90 = scalar_select %p89, %s88, 16
    %p91 = scmp.lt.s32.totalorder %s87, %s82
    %p92 = scmp.gt.s32.totalorder %s90, %s36
    %p93 = pnand %p91, %p92
    %p94 = pneg %p93
    %p95 = por %p86, %p94
    %p96 = scmp.gt.s32.totalorder %s87, 16
    %s97 = scalar_select %p96, %s87, 16
    %s98 = ssub.s32 %s97, 16
    %s99 = sadd.s32 %s81, 4294967288
    %p100 = scmp.lt.s32.totalorder %s98, %s82
    %p101 = scmp.gt.s32.totalorder %s99, %s36
    %p102 = pnand %p100, %p101
    %p103 = pneg %p102
    %p104 = por %p95, %p103
    %p105 = scmp.gt.s32.totalorder %s82, 16
    %p106 = por %p104, %p105
    // Predicated region
    $region14: #{tpu_custom_call.1} parent=1 // pred_check
      %p107 = pneg %p106
    $region15: #{tpu_custom_call.1} parent=1 // pred_check_branch
      %109 = sbr.rel (%p107) target = $region17
    $region16: #{tpu_custom_call.1} parent=1 // pred_region
      %v110 = vlaneseq
      %v111 = vshrl.u32 %v110, 7
      %v112 = vadd.s32 %v111, 8
      %v113 = vstv %s35
      %v114 = vadd.s32 %v113, %v111
      %v115 = vadd.s32 %v113, %v112
      %v116 = vlaneseq
      %v117 = vand.u32 %v116, 127
      %v118 = vstv %s36
      %v119 = vadd.s32 %v118, %v117
      %v120 = vadd.s32 %v114, 8
      %v121 = vadd.s32 %v115, 8
      %vm122 = vcmp.lt.s32.totalorder %v120, 0
      %v123 = vsub.s32 0, %v120
      %v124 = vsel %vm122, %v123, %v120
      %v125 = vshrl.u32 %v124, 4
      %v126 = vand.u32 %v124, 15
      %v127 = vsub.s32 0, %v126
      %v128 = vsel %vm122, %v127, %v126
      %vm129 = vcmp.lt.s32.totalorder %v121, 0
      %v130 = vsub.s32 0, %v121
      %v131 = vsel %vm129, %v130, %v121
      %v132 = vshrl.u32 %v131, 4
      %v133 = vand.u32 %v131, 15
      %v134 = vsub.s32 0, %v133
      %v135 = vsel %vm129, %v134, %v133
      %vm136 = vcmp.eq.s32.totalorder %v119, %v128
      %vm137 = vcmp.eq.s32.totalorder %v119, %v135
      %vm138 = vcmp.lt.s32.totalorder %v119, 16
      %vm139 = vcmp.ne.s32.totalorder %v119, %v114
      %vm140 = vcmp.ne.s32.totalorder %v119, %v115
      %vm141 = vmxor %vm136, 1
      %vm142 = vmxor %vm137, 1
      %vm143 = vmand %vm139, %vm141
      %vm144 = vmand %vm140, %vm142
      %vm145 = vmand %vm138, %vm143
      %vm146 = vmand %vm138, %vm144
      %v147 = vld [vmem:[#allocation2] sm:$0xff]
      %v148 = vld [vmem:[#allocation2 + $0x8] sm:$0xff]
      %v149 = vsel %vm145, %v76, 0.0
      %v150 = vsel %vm146, %v78, 0.0
      %v151 = vadd.f32 %v147, %v149
      %v152 = vadd.f32 %v148, %v150
      %vm153 = vcmask 130048
      %154 = vst.msk [vmem:[#allocation2] sm:$0xff] %vm153, %v151
      %155 = vst.msk [vmem:[#allocation2 + $0x8] sm:$0xff] %vm153, %v152
      %v156 = vld [vmem:[#allocation3] sm:$0xff]
      %v157 = vld [vmem:[#allocation3 + $0x8] sm:$0xff]
      %v158 = vsel %vm136, %v71, 0.0
      %v159 = vsel %vm137, %v73, 0.0
      %v160 = vsel %vm153, %v158, 0.0
      %161 = vadd.xlane.f32.xlu0 %v160
      %v162 = vpop.xlane.xlu0 %161
      %v163 = vsel %vm153, %v159, 0.0
      %164 = vadd.xlane.f32.xlu0 %v163
      %v165 = vpop.xlane.xlu0 %164
      %v166 = vadd.f32 %v156, %v162
      %v167 = vadd.f32 %v157, %v165
      %vm168 = vcmask 7168
      %169 = vst.msk [vmem:[#allocation3] sm:$0xff] %vm168, %v166
      %170 = vst.msk [vmem:[#allocation3 + $0x8] sm:$0xff] %vm168, %v167
    $region17: #{tpu_custom_call.1} parent=1 // pred_fallthru
      _
    %p171 = pneg %p106
    // Predicated region
    $region18: #{tpu_custom_call.1} parent=1 // pred_check
      _
    $region19: #{tpu_custom_call.1} parent=1 // pred_check_branch
      %173 = sbr.rel (%p106) target = $region21
    $region20: #{tpu_custom_call.1} parent=1 // pred_region
      %v174 = vld [vmem:[#allocation2] sm:$0xff]
      %v175 = vld [vmem:[#allocation2 + $0x8] sm:$0xff]
      %v176 = vadd.f32 %v174, %v76
      %v177 = vadd.f32 %v175, %v78
      %vm178 = vcmask 130048
      %179 = vst.msk [vmem:[#allocation2] sm:$0xff] %vm178, %v176
      %180 = vst.msk [vmem:[#allocation2 + $0x8] sm:$0xff] %vm178, %v177
    $region21: #{tpu_custom_call.1} parent=1 // pred_fallthru
      _
    // Predicated region
    $region22: #{tpu_custom_call.1} parent=1 // pred_check
      %p181 = pneg %p25
    $region23: #{tpu_custom_call.1} parent=1 // pred_check_branch
      %183 = sbr.rel (%p181) target = $region25
    $region24: #{tpu_custom_call.1} parent=1 // pred_region
      %v184 = vld [vmem:[#allocation2] sm:$0xff]
      %v185 = vld [vmem:[#allocation2 + $0x8] sm:$0xff]
      %vm186 = vcmask 130048
      %v187 = vsel %vm186, %v184, 0.0
      %188 = vadd.xlane.f32.xlu0 %v187
      %v189 = vpop.xlane.xlu0 %188
      %v190 = vsel %vm186, %v185, 0.0
      %191 = vadd.xlane.f32.xlu0 %v190
      %v192 = vpop.xlane.xlu0 %191
      %v193 = vadd.f32 %v189, 1e-06
      %v194 = vadd.f32 %v192, 1e-06
      %v195 = vadd.f32 %v193, 1e-06
      %v196 = vadd.f32 %v194, 1e-06
      %v197 = vlog2.pop %v195
      %v198 = vmul.f32 %v197, 0.6931472
      %v199 = vlog2.pop %v196
      %v200 = vmul.f32 %v199, 0.6931472
      %v201 = vld [vmem:[#allocation3] sm:$0xff]
      %v202 = vld [vmem:[#allocation3 + $0x8] sm:$0xff]
      %v203 = vsub.f32 %v198, %v201
      %v204 = vsub.f32 %v200, %v202
      %vm205 = vcmask 7168
      %206 = vst.msk [vmem:[%s1] sm:$0xff] %vm205, %v203
      %207 = vst.msk [vmem:[%s1 + $0x8] sm:$0xff] %vm205, %v204
    $region25: #{tpu_custom_call.1} parent=1 // pred_fallthru
      _
    // Predicated region
    $region26: #{tpu_custom_call.1} parent=1 // pred_check
      _
    $region27: #{tpu_custom_call.1} parent=1 // pred_check_branch
      %209 = sbr.rel (0) target = $region29
    $region28: #{tpu_custom_call.1} parent=1 // pred_region
      _
    $region29: #{tpu_custom_call.1} parent=1 // pred_fallthru
      _
    // Predicated region
    $region30: #{tpu_custom_call.1} parent=1 // pred_check
      _
    $region31: #{tpu_custom_call.1} parent=1 // pred_check_branch
      %211 = sbr.rel (0) target = $region33
    $region32: #{tpu_custom_call.1} parent=1 // pred_region
      _
    $region33: #{tpu_custom_call.1} parent=1 // pred_fallthru
      _
    %212 = vsyncpa [#allocation5], 1

</llo_original>
